<compile_context>
chip_gen: v7x
topology: tpu7x:2x2x1
jax: 0.10.0
libtpu: 0.0.40
codegen_flags: <defaults>
</compile_context>

<pallas_src>
import jax
import jax.numpy as jnp
from jax.experimental import pallas as pl
from jax.experimental.pallas import tpu as pltpu

_LANE = 128


def _round_up(x, m):
    return ((x + m - 1) // m) * m


def policy_net_kernel(x_ref, w1_ref, b1_ref, w2_ref, b2_ref, out_ref):
    # fc1 + ReLU: bf16 MXU matmul with f32 accumulation; bias add / relu on VPU.
    h = jnp.dot(x_ref[...], w1_ref[...], preferred_element_type=jnp.float32)
    h = jnp.maximum(h + b1_ref[...], 0.0)

    # fc2: the fc2 output lanes are padded up to a multiple of 128 *in VMEM
    # only*; padded lanes carry a -1e30 bias so exp() maps them to exactly 0.
    logits = jnp.dot(
        h.astype(w2_ref.dtype), w2_ref[...], preferred_element_type=jnp.float32
    )
    logits = logits + b2_ref[...]

    # numerically stable row softmax with exact normalization.
    m = jnp.max(logits, axis=1, keepdims=True)
    e = jnp.exp(logits - m)
    denom = jnp.sum(e, axis=1, keepdims=True)
    probs = e / denom

    # only the true action lanes go back to HBM (no 128-lane padded writeback).
    out_ref[...] = probs[:, : out_ref.shape[1]].astype(out_ref.dtype)


def policy_net_forward(x, w1, b1, w2, b2, *, tile_b=1024, matmul_dtype=jnp.bfloat16):
    batch, state_dim = x.shape
    hidden_dim, action_dim = w2.shape

    # ---- pad the fc2 lanes to a multiple of 128 (VMEM-resident copies only) --
    act_pad = _round_up(action_dim, _LANE)
    if act_pad != action_dim:
        w2p = jnp.pad(w2, ((0, 0), (0, act_pad - action_dim)))
        b2p = jnp.pad(b2, ((0, 0), (0, act_pad - action_dim)), constant_values=-1e30)
    else:
        w2p, b2p = w2, b2

    # ---- bf16 matmul operands (halves the x HBM stream, native MXU rate);
    #      accumulation / bias / softmax stay in f32 inside the kernel. --------
    xk = x.astype(matmul_dtype)
    w1k = w1.astype(matmul_dtype)
    w2k = w2p.astype(matmul_dtype)
    b1k = b1.astype(jnp.float32)
    b2k = b2p.astype(jnp.float32)  # -1e30 sentinel stays f32-exact

    # ---- batch tiling (no wrapper-side jnp.pad of x) --------------------------
    sub = 8 * (4 // jnp.dtype(matmul_dtype).itemsize)  # 8 for f32, 16 for bf16
    if batch >= 2 * sub:
        # Keep the grid >= 2 steps so the "parallel" batch axis can be split
        # across both TensorCores on v7x; ragged last tile is handled by
        # Pallas (out-of-bounds output rows are dropped; rows are independent
        # so undefined padded input rows never contaminate valid rows).
        tile_b = min(_round_up(tile_b, sub), _round_up(-(-batch // 2), sub))
    else:
        # Single full-extent block: block dim == array dim, no alignment rule.
        tile_b = batch
    grid = (pl.cdiv(batch, tile_b),)

    # ---- honest advisory cost estimate ---------------------------------------
    flops = (
        2 * batch * state_dim * hidden_dim
        + 2 * batch * hidden_dim * act_pad
        + 6 * batch * act_pad
    )
    bytes_accessed = (
        xk.dtype.itemsize * batch * state_dim
        + w1k.dtype.itemsize * state_dim * hidden_dim
        + w2k.dtype.itemsize * hidden_dim * act_pad
        + 4 * (hidden_dim + act_pad)
        + 4 * batch * action_dim
    )
    cost = pl.CostEstimate(
        flops=flops,
        transcendentals=batch * action_dim,
        bytes_accessed=bytes_accessed,
    )

    out = pl.pallas_call(
        policy_net_kernel,
        out_shape=jax.ShapeDtypeStruct((batch, action_dim), jnp.float32),
        grid=grid,
        in_specs=[
            # streamed per grid step (double-buffered by Pallas)
            pl.BlockSpec((tile_b, state_dim), lambda i: (i, 0)),
            # VMEM-resident across all grid steps
            pl.BlockSpec((state_dim, hidden_dim), lambda i: (0, 0)),
            pl.BlockSpec((1, hidden_dim), lambda i: (0, 0)),
            pl.BlockSpec((hidden_dim, act_pad), lambda i: (0, 0)),
            pl.BlockSpec((1, act_pad), lambda i: (0, 0)),
        ],
        # last block dim == full array dim (action_dim): lane-narrow but tiny
        # writeback beats a 128-lane padded slab by ~16x in HBM bytes.
        out_specs=pl.BlockSpec((tile_b, action_dim), lambda i: (i, 0)),
        compiler_params=pltpu.CompilerParams(
            dimension_semantics=("parallel",),
            # VMEM use is tiny at these shapes; if hidden_dim / tile_b ever
            # grow, re-derive the budget and set vmem_limit_bytes here
            # (v7x: 64 MiB physical, 32 MiB scoped default).
        ),
        cost_estimate=cost,
    )(xk, w1k, b1k, w2k, b2k)

    return out


def init_params(key, state_dim, hidden_dim, action_dim):
    """Deterministic init mimicking torch.nn.Linear's U(-1/sqrt(fan_in), 1/sqrt(fan_in))."""
    k1, k2, k3, k4 = jax.random.split(key, 4)
    bound1 = 1.0 / jnp.sqrt(state_dim)
    bound2 = 1.0 / jnp.sqrt(hidden_dim)
    # stored as [in, out] (transposed vs torch's [out, in]) so the kernel uses x @ W
    w1 = jax.random.uniform(k1, (state_dim, hidden_dim), jnp.float32, -bound1, bound1)
    b1 = jax.random.uniform(k2, (1, hidden_dim), jnp.float32, -bound1, bound1)
    w2 = jax.random.uniform(k3, (hidden_dim, action_dim), jnp.float32, -bound2, bound2)
    b2 = jax.random.uniform(k4, (1, action_dim), jnp.float32, -bound2, bound2)
    return w1, b1, w2, b2


if __name__ == "__main__":
    batch, state_dim, hidden_dim, action_dim = 8, 16, 32, 8

    key = jax.random.PRNGKey(0)
    kx, kp = jax.random.split(key)
    x = jax.random.normal(kx, (batch, state_dim), jnp.float32)
    w1, b1, w2, b2 = init_params(kp, state_dim, hidden_dim, action_dim)

    out = policy_net_forward(x, w1, b1, w2, b2)
    out = jax.block_until_ready(out)

    # reference with the same bf16 operand rounding as the kernel (f32 accum)
    bf = lambda a: a.astype(jnp.bfloat16).astype(jnp.float32)
    h_ref = jnp.maximum(bf(x) @ bf(w1) + b1, 0.0)
    ref = jax.nn.softmax(bf(h_ref) @ bf(w2) + b2, axis=1)

    assert out.shape == (batch, action_dim)
    assert jnp.allclose(out, ref, atol=5e-3, rtol=5e-3), float(jnp.max(jnp.abs(out - ref)))
    assert jnp.allclose(jnp.sum(out, axis=1), 1.0, atol=1e-4)

    print("KERNEL_OK")
</pallas_src>

<mosaic_0001>
module attributes {stable_mosaic.version = 11 : i64} {
  func.func @policy_net_kernel(%arg0: i32, %arg1: memref<8x16xbf16, #tpu.memory_space<vmem>>, %arg2: memref<16x32xbf16, #tpu.memory_space<vmem>>, %arg3: memref<1x32xf32, #tpu.memory_space<vmem>>, %arg4: memref<32x128xbf16, #tpu.memory_space<vmem>>, %arg5: memref<1x128xf32, #tpu.memory_space<vmem>>, %arg6: memref<8x8xf32, #tpu.memory_space<vmem>>) attributes {dimension_semantics = [#tpu.dimension_semantics<parallel>], iteration_bounds = array<i64: 1>, scalar_prefetch = 0 : i64, scratch_operands = 0 : i64, tpu.core_type = #tpu.core_type<tc>, window_params = [{transform_indices = @transform_0, window_bounds = array<i64: 8, 16>}, {pipeline_mode = #tpu.pipeline_mode<synchronous>, transform_indices = @transform_1, window_bounds = array<i64: 16, 32>}, {pipeline_mode = #tpu.pipeline_mode<synchronous>, transform_indices = @transform_2, window_bounds = array<i64: 1, 32>}, {pipeline_mode = #tpu.pipeline_mode<synchronous>, transform_indices = @transform_3, window_bounds = array<i64: 32, 128>}, {pipeline_mode = #tpu.pipeline_mode<synchronous>, transform_indices = @transform_4, window_bounds = array<i64: 1, 128>}, {transform_indices = @transform_5, window_bounds = array<i64: 8, 8>}]} {
    %c0 = arith.constant 0 : index
    %c0_0 = arith.constant 0 : index
    %0 = vector.load %arg1[%c0, %c0_0] : memref<8x16xbf16, #tpu.memory_space<vmem>>, vector<8x16xbf16>
    %c0_1 = arith.constant 0 : index
    %c0_2 = arith.constant 0 : index
    %1 = vector.load %arg2[%c0_1, %c0_2] : memref<16x32xbf16, #tpu.memory_space<vmem>>, vector<16x32xbf16>
    %cst = arith.constant dense<0.000000e+00> : vector<8x32xf32>
    %2 = tpu.matmul %0, %1, %cst {dimension_numbers = #tpu.dot_dimension_numbers<[1], [0], [0], [1], [0, 0, 1, 1], [], []>} : vector<8x16xbf16>, vector<16x32xbf16>, vector<8x32xf32> -> vector<8x32xf32>
    %c0_3 = arith.constant 0 : index
    %c0_4 = arith.constant 0 : index
    %3 = vector.load %arg3[%c0_3, %c0_4] : memref<1x32xf32, #tpu.memory_space<vmem>>, vector<1x32xf32>
    %4 = vector.broadcast %3 : vector<1x32xf32> to vector<8x32xf32>
    %5 = arith.addf %2, %4 : vector<8x32xf32>
    %cst_5 = arith.constant 0.000000e+00 : f32
    %6 = vector.broadcast %cst_5 : f32 to vector<8x32xf32>
    %7 = arith.maximumf %5, %6 : vector<8x32xf32>
    %8 = arith.truncf %7 : vector<8x32xf32> to vector<8x32xbf16>
    %c0_6 = arith.constant 0 : index
    %c0_7 = arith.constant 0 : index
    %9 = vector.load %arg4[%c0_6, %c0_7] : memref<32x128xbf16, #tpu.memory_space<vmem>>, vector<32x128xbf16>
    %cst_8 = arith.constant dense<0.000000e+00> : vector<8x128xf32>
    %10 = tpu.matmul %8, %9, %cst_8 {dimension_numbers = #tpu.dot_dimension_numbers<[1], [0], [0], [1], [0, 0, 1, 1], [], []>} : vector<8x32xbf16>, vector<32x128xbf16>, vector<8x128xf32> -> vector<8x128xf32>
    %c0_9 = arith.constant 0 : index
    %c0_10 = arith.constant 0 : index
    %11 = vector.load %arg5[%c0_9, %c0_10] : memref<1x128xf32, #tpu.memory_space<vmem>>, vector<1x128xf32>
    %12 = vector.broadcast %11 : vector<1x128xf32> to vector<8x128xf32>
    %13 = arith.addf %10, %12 : vector<8x128xf32>
    %cst_11 = arith.constant dense<0xFF800000> : vector<8xf32>
    %14 = vector.multi_reduction <maximumf>, %13, %cst_11 [1] : vector<8x128xf32> to vector<8xf32>
    %15 = vector.shape_cast %14 : vector<8xf32> to vector<8x1xf32>
    %16 = vector.broadcast %15 : vector<8x1xf32> to vector<8x128xf32>
    %17 = arith.subf %13, %16 : vector<8x128xf32>
    %18 = math.exp %17 : vector<8x128xf32>
    %cst_12 = arith.constant dense<0.000000e+00> : vector<8xf32>
    %19 = vector.multi_reduction <add>, %18, %cst_12 [1] : vector<8x128xf32> to vector<8xf32>
    %20 = vector.shape_cast %19 : vector<8xf32> to vector<8x1xf32>
    %21 = vector.broadcast %20 : vector<8x1xf32> to vector<8x128xf32>
    %22 = arith.divf %18, %21 : vector<8x128xf32>
    %23 = vector.extract_strided_slice %22 {offsets = [0, 0], sizes = [8, 8], strides = [1, 1]} : vector<8x128xf32> to vector<8x8xf32>
    %c0_13 = arith.constant 0 : index
    %c0_14 = arith.constant 0 : index
    %24 = vector.load %arg6[%c0_13, %c0_14] : memref<8x8xf32, #tpu.memory_space<vmem>>, vector<8x8xf32>
    tpu.vector_store %arg6[%c0_13, %c0_14], %23 {strides = array<i32>} : memref<8x8xf32, #tpu.memory_space<vmem>>, vector<8x8xf32>,
    return
  }
  func.func @transform_0(%arg0: i32) -> (i32, i32) {
    %c0_i32 = arith.constant 0 : i32
    %c0_i32_0 = arith.constant 0 : i32
    return %arg0, %c0_i32 : i32, i32
  }
  func.func @transform_1(%arg0: i32) -> (i32, i32) {
    %c0_i32 = arith.constant 0 : i32
    %c0_i32_0 = arith.constant 0 : i32
    %c0_i32_1 = arith.constant 0 : i32
    return %c0_i32, %c0_i32_0 : i32, i32
  }
  func.func @transform_2(%arg0: i32) -> (i32, i32) {
    %c0_i32 = arith.constant 0 : i32
    %c0_i32_0 = arith.constant 0 : i32
    %c0_i32_1 = arith.constant 0 : i32
    return %c0_i32, %c0_i32_0 : i32, i32
  }
  func.func @transform_3(%arg0: i32) -> (i32, i32) {
    %c0_i32 = arith.constant 0 : i32
    %c0_i32_0 = arith.constant 0 : i32
    %c0_i32_1 = arith.constant 0 : i32
    return %c0_i32, %c0_i32_0 : i32, i32
  }
  func.func @transform_4(%arg0: i32) -> (i32, i32) {
    %c0_i32 = arith.constant 0 : i32
    %c0_i32_0 = arith.constant 0 : i32
    %c0_i32_1 = arith.constant 0 : i32
    return %c0_i32, %c0_i32_0 : i32, i32
  }
  func.func @transform_5(%arg0: i32) -> (i32, i32) {
    %c0_i32 = arith.constant 0 : i32
    %c0_i32_0 = arith.constant 0 : i32
    return %arg0, %c0_i32 : i32, i32
  }
}

</mosaic_0001>

<llo_original>
// kernel: tpu_custom_call.1
$region0: #{tpu_custom_call.1}
  #allocation0 [shape = 'u32[]', space=smem, size = 0x4, offset = 0x4, fixed_abs, tag = 'smem constant byte address 0x4 - core index']
  #allocation1 [shape = 'u32[144,128]{1,0:T(1,128)}', space=vmem, size = 0x12000, scoped, tag = 'internal scratch']
  %s0 = inlined_call_operand.hbm [shape: bf16[8,16], index: 0, kind: input, shape index: {}]
  %s1 = inlined_call_operand.hbm [shape: bf16[16,32], index: 1, kind: input, shape index: {}]
  %s2 = inlined_call_operand.vmem [shape: f32[1,32], index: 2, kind: input, shape index: {}]
  %s3 = inlined_call_operand.hbm [shape: bf16[32,128], index: 3, kind: input, shape index: {}]
  %s4 = inlined_call_operand.vmem [shape: f32[1,128], index: 4, kind: input, shape index: {}]
  %s5 = inlined_call_operand.hbm [shape: f32[8,8], index: 5, kind: output, shape index: {}]
  %s6 = sld [smem:[#allocation0]]
  $region42: #{tpu_custom_call.1} parent=0
    _
  %s8 = ssub.s32 1, %s6
  %s9 = scalar_select 0, %s8, %s6
  $region1: #{tpu_custom_call.1} parent=0
    #allocation2 [shape = 'u8[2048]{0}', space=vmem, size = 0x800, scoped, tag = 'input window, operand 0, single buffered']
    #allocation3 [shape = 's32[1]{0}', space=sflag, size = 0x4, scoped, tag = 'scoped memory for tpu_custom_call.1']
    #allocation4 [shape = 's32[1]{0}', space=sflag, size = 0x4, scoped, tag = 'scoped memory for tpu_custom_call.1']
    #allocation5 [shape = 'u8[4096]{0}', space=vmem, size = 0x1000, scoped, tag = 'input window, operand 1, single buffered']
    #allocation6 [shape = 's32[1]{0}', space=sflag, size = 0x4, scoped, tag = 'scoped memory for tpu_custom_call.1']
    #allocation7 [shape = 'u8[8192]{0}', space=vmem, size = 0x2000, scoped, tag = 'input window, operand 3, single buffered']
    #allocation8 [shape = 'u8[4096]{0}', space=vmem, size = 0x1000, scoped, tag = 'output window, operand 0, single buffered']
    %10 = vsyncpa [#allocation3], 0
    %11 = vsyncpa [#allocation6], 0
    %12 = vsyncpa [#allocation4], 0
    // Predicated region
    $region2: #{tpu_custom_call.1} parent=1 // pred_check
      _
    $region3: #{tpu_custom_call.1} parent=1 // pred_check_branch
      %14 = sbr.rel (0) target = $region5
    $region4: #{tpu_custom_call.1} parent=1 // pred_region
      %s16 = ssub.s32 64, 64
      %17 = vsyncadd [#allocation3], %s16
      %s19 = sshll.u32 [#allocation2], 4
      %s20 = int_to_ptr.vmem [resolvable:$true] %s19
      %22 = dma.hbm_to_vmem [thread:$0]  %s0, 64, %s20, [#allocation3]
    $region5: #{tpu_custom_call.1} parent=1 // pred_fallthru
      _
    // Predicated region
    $region6: #{tpu_custom_call.1} parent=1 // pred_check
      _
    $region7: #{tpu_custom_call.1} parent=1 // pred_check_branch
      %24 = sbr.rel (0) target = $region9
    $region8: #{tpu_custom_call.1} parent=1 // pred_region
      %s26 = ssub.s32 128, 128
      %27 = vsyncadd [#allocation6], %s26
      %s28 = sshll.u32 [#allocation5], 4
      %s29 = int_to_ptr.vmem [resolvable:$true] %s28
      %34 = dma.hbm_to_vmem [thread:$0]  %s1, 128, %s29, [#allocation6], 64, 64, 4
    $region9: #{tpu_custom_call.1} parent=1 // pred_fallthru
      _
    // Predicated region
    $region10: #{tpu_custom_call.1} parent=1 // pred_check
      _
    $region11: #{tpu_custom_call.1} parent=1 // pred_check_branch
      %36 = sbr.rel (0) target = $region13
    $region12: #{tpu_custom_call.1} parent=1 // pred_region
      _
    $region13: #{tpu_custom_call.1} parent=1 // pred_fallthru
      _
    // Predicated region
    $region14: #{tpu_custom_call.1} parent=1 // pred_check
      _
    $region15: #{tpu_custom_call.1} parent=1 // pred_check_branch
      %38 = sbr.rel (0) target = $region17
    $region16: #{tpu_custom_call.1} parent=1 // pred_region
      %s40 = ssub.s32 256, 256
      %41 = vsyncadd [#allocation6], %s40
      %s42 = sshll.u32 [#allocation7], 4
      %s43 = int_to_ptr.vmem [resolvable:$true] %s42
      %48 = dma.hbm_to_vmem [thread:$0]  %s3, 256, %s43, [#allocation6], 64, 64, 4
    $region17: #{tpu_custom_call.1} parent=1 // pred_fallthru
      _
    // Predicated region
    $region18: #{tpu_custom_call.1} parent=1 // pred_check
      _
    $region19: #{tpu_custom_call.1} parent=1 // pred_check_branch
      %50 = sbr.rel (0) target = $region21
    $region20: #{tpu_custom_call.1} parent=1 // pred_region
      _
    $region21: #{tpu_custom_call.1} parent=1 // pred_fallthru
      _
    // Predicated region
    $region22: #{tpu_custom_call.1} parent=1 // pred_check
      _
    $region23: #{tpu_custom_call.1} parent=1 // pred_check_branch
      %52 = sbr.rel (0) target = $region25
    $region24: #{tpu_custom_call.1} parent=1 // pred_region
      %53 = dma.done [#allocation3], 64
    $region25: #{tpu_custom_call.1} parent=1 // pred_fallthru
      _
    // Predicated region
    $region26: #{tpu_custom_call.1} parent=1 // pred_check
      _
    $region27: #{tpu_custom_call.1} parent=1 // pred_check_branch
      %55 = sbr.rel (0) target = $region29
    $region28: #{tpu_custom_call.1} parent=1 // pred_region
      %56 = dma.done [#allocation6], 128
    $region29: #{tpu_custom_call.1} parent=1 // pred_fallthru
      _
    // Predicated region
    $region30: #{tpu_custom_call.1} parent=1 // pred_check
      _
    $region31: #{tpu_custom_call.1} parent=1 // pred_check_branch
      %58 = sbr.rel (0) target = $region33
    $region32: #{tpu_custom_call.1} parent=1 // pred_region
      %59 = dma.done [#allocation6], 256
    $region33: #{tpu_custom_call.1} parent=1 // pred_fallthru
      _
    %v61 = vld [vmem:[#allocation2] sm:$0xf]
    %v62 = vld [vmem:[#allocation5] sm:$0xf]
    %v63 = vld [vmem:[#allocation5 + $0x4] sm:$0xf]
    %v64 = vld [vmem:[%s2] sm:$0x1]
    %v66 = vlaneseq
    %v67 = vshrl.u32 %v66, 7
    %v68 = vsub.s32 0, %v67
    %v69 = vrot.slane %v64, %v68
    %v73 = vunpack.c.l.b16 %v62
    %v74 = vunpack.c.l.b16 %v63
    %v75 = vpack.c.b16 %v74, %v73
    %vm77 = vcmask 130048
    %v79 = vsel %vm77, %v61, 0
    %81 = vmatprep.subr.bf16.mxu0 0
    %82 = vmatpush1.bf16.msra.mxu0 %v75
    %83 = vmatprep.subr.bf16.mxu0 0
    %84 = vmatpush1.bf16.msra.mxu0 0
    %85 = vmatprep.subr.bf16.mxu0 0
    %86 = vmatpush1.bf16.msra.mxu0 0
    %87 = vmatprep.subr.bf16.mxu0 0
    %88 = vmatpush1.bf16.msra.mxu0 0
    %89 = vmatprep.subr.bf16.mxu0 0
    %90 = vmatpush1.bf16.msra.mxu0 0
    %91 = vmatprep.subr.bf16.mxu0 0
    %92 = vmatpush1.bf16.msra.mxu0 0
    %93 = vmatprep.subr.bf16.mxu0 0
    %94 = vmatpush1.bf16.msra.mxu0 0
    %95 = vmatprep.subr.bf16.mxu0 0
    %96 = vmatpush1.bf16.msra.mxu0 0
    %97 = vmatprep.subr.bf16.mxu0 0
    %98 = vmatpush1.bf16.msra.mxu0 0
    %99 = vmatprep.subr.bf16.mxu0 0
    %100 = vmatpush1.bf16.msra.mxu0 0
    %101 = vmatprep.subr.bf16.mxu0 0
    %102 = vmatpush1.bf16.msra.mxu0 0
    %103 = vmatprep.subr.bf16.mxu0 0
    %104 = vmatpush1.bf16.msra.mxu0 0
    %105 = vmatprep.subr.bf16.mxu0 0
    %106 = vmatpush1.bf16.msra.mxu0 0
    %107 = vmatprep.subr.bf16.mxu0 0
    %108 = vmatpush1.bf16.msra.mxu0 0
    %109 = vmatprep.subr.bf16.mxu0 0
    %110 = vmatpush1.bf16.msra.mxu0 0
    %111 = vmatprep.subr.bf16.mxu0 0
    %112 = vmatpush1.bf16.msra.mxu0 0
    %113 = vmatprep.mubr.bf16.mxu0 0
    %114 = vmatmul.mubr.bf16.gmra.mrb[0].mxu0 %v79
    %v115 = vpop.f32.mrb[0].mxu0
    %v116 = vadd.f32 %v69, %v115
    %v117 = vpop.f32.mrb[0].mxu0
    %v118 = vpop.f32.mrb[0].mxu0
    %v119 = vpop.f32.mrb[0].mxu0
    %120 = vdwg.mxu0
    %v121 = vmax.f32 %v116, 0.0
    %v122 = vpack.c.bf16 %v121, %v121
    %v123 = vld [vmem:[#allocation7] sm:$0xf]
    %v124 = vld [vmem:[#allocation7 + $0x4] sm:$0xf]
    %v125 = vld [vmem:[#allocation7 + $0x8] sm:$0xf]
    %v126 = vld [vmem:[#allocation7 + $0xc] sm:$0xf]
    %v127 = vld [vmem:[%s4] sm:$0x1]
    %v129 = vlaneseq
    %v130 = vshrl.u32 %v129, 7
    %v131 = vsub.s32 0, %v130
    %v132 = vrot.slane %v127, %v131
    %v138 = vunpack.c.l.b16 %v123
    %v139 = vunpack.c.l.b16 %v124
    %v140 = vunpack.c.l.b16 %v125
    %v141 = vunpack.c.l.b16 %v126
    %v142 = vpack.c.b16 %v139, %v138
    %v143 = vpack.c.b16 %v141, %v140
    %vm146 = vcmask 261120
    %v148 = vsel %vm146, %v122, 0
    %150 = vmatprep.subr.bf16.mxu0 0
    %151 = vmatpush1.bf16.msra.mxu0 %v142
    %152 = vmatprep.subr.bf16.mxu0 0
    %153 = vmatpush1.bf16.msra.mxu0 %v143
    %154 = vmatprep.subr.bf16.mxu0 0
    %155 = vmatpush1.bf16.msra.mxu0 0
    %156 = vmatprep.subr.bf16.mxu0 0
    %157 = vmatpush1.bf16.msra.mxu0 0
    %158 = vmatprep.subr.bf16.mxu0 0
    %159 = vmatpush1.bf16.msra.mxu0 0
    %160 = vmatprep.subr.bf16.mxu0 0
    %161 = vmatpush1.bf16.msra.mxu0 0
    %162 = vmatprep.subr.bf16.mxu0 0
    %163 = vmatpush1.bf16.msra.mxu0 0
    %164 = vmatprep.subr.bf16.mxu0 0
    %165 = vmatpush1.bf16.msra.mxu0 0
    %166 = vmatprep.subr.bf16.mxu0 0
    %167 = vmatpush1.bf16.msra.mxu0 0
    %168 = vmatprep.subr.bf16.mxu0 0
    %169 = vmatpush1.bf16.msra.mxu0 0
    %170 = vmatprep.subr.bf16.mxu0 0
    %171 = vmatpush1.bf16.msra.mxu0 0
    %172 = vmatprep.subr.bf16.mxu0 0
    %173 = vmatpush1.bf16.msra.mxu0 0
    %174 = vmatprep.subr.bf16.mxu0 0
    %175 = vmatpush1.bf16.msra.mxu0 0
    %176 = vmatprep.subr.bf16.mxu0 0
    %177 = vmatpush1.bf16.msra.mxu0 0
    %178 = vmatprep.subr.bf16.mxu0 0
    %179 = vmatpush1.bf16.msra.mxu0 0
    %180 = vmatprep.subr.bf16.mxu0 0
    %181 = vmatpush1.bf16.msra.mxu0 0
    %182 = vmatprep.mubr.bf16.mxu0 0
    %183 = vmatmul.mubr.bf16.gmra.mrb[0].mxu0 %v148
    %v184 = vpop.f32.mrb[0].mxu0
    %v185 = vadd.f32 %v132, %v184
    %v186 = vpop.f32.mrb[0].mxu0
    %v187 = vpop.f32.mrb[0].mxu0
    %v188 = vpop.f32.mrb[0].mxu0
    %189 = vdwg.mxu0
    %190 = vmax.xlane.f32.xlu0 %v185
    %v191 = vpop.xlane.xlu0 %190
    %v192 = vsub.f32 %v185, %v191
    %v193 = vmul.f32 %v192, 1.442695
    %v194 = vpow.pop %v193
    %195 = vadd.xlane.f32.xlu0 %v194
    %v196 = vpop.xlane.xlu0 %195
    %v197 = vrcp.pop %v196
    %v198 = vmul.f32 %v194, %v197
    %vm199 = vcmask 64512
    %200 = vst.msk [vmem:[#allocation8] sm:$0xff] %vm199, %v198
    // Predicated region
    $region34: #{tpu_custom_call.1} parent=1 // pred_check
      _
    $region35: #{tpu_custom_call.1} parent=1 // pred_check_branch
      %202 = sbr.rel (0) target = $region37
    $region36: #{tpu_custom_call.1} parent=1 // pred_region
      %s204 = ssub.s32 128, 128
      %205 = vsyncadd [#allocation4], %s204
      %s207 = sshll.u32 [#allocation8], 4
      %s208 = int_to_ptr.vmem [resolvable:$true] %s207
      %210 = dma.vmem_to_hbm [thread:$0]  %s208, 128, %s5, [#allocation4]
    $region37: #{tpu_custom_call.1} parent=1 // pred_fallthru
      _
    // Predicated region
    $region38: #{tpu_custom_call.1} parent=1 // pred_check
      _
    $region39: #{tpu_custom_call.1} parent=1 // pred_check_branch
      %212 = sbr.rel (0) target = $region41
    $region40: #{tpu_custom_call.1} parent=1 // pred_region
      %213 = dma.done [#allocation4], 128
    $region41: #{tpu_custom_call.1} parent=1 // pred_fallthru
      _
    %214 = vsyncpa [#allocation3], 1
    %215 = vsyncpa [#allocation6], 1
    %216 = vsyncpa [#allocation4], 1

</llo_original>
